<compile_context>
chip_gen: v7x
topology: tpu7x:2x2x1
jax: 0.10.0
libtpu: 0.0.40
codegen_flags: <defaults>
</compile_context>

<pallas_src>
import math

import jax
import jax.numpy as jnp
from jax.experimental import pallas as pl
from jax.experimental.pallas import tpu as pltpu

# ---------------- module hyper-parameters (from __init__) ----------------
N_POLY = 3          # n: nodes per segment (quadratic polynomial)
SEGMENTS = 2        # piecewise segments
IN_CHANNELS = 4
OUT_CHANNELS = 4
KERNEL_SIZE = 3
LENGTH = 2.0        # interpolation range [-1, 1]
RESCALE_OUTPUT = False

BASIS = (N_POLY - 1) * SEGMENTS + 1                 # basis size per input channel
CIN = BASIS * IN_CHANNELS                           # conv-transpose in_channels
IN_FEATURES = CIN * KERNEL_SIZE * KERNEL_SIZE       # weight init range denominator
RESCALE = (1.0 / (IN_CHANNELS * KERNEL_SIZE * KERNEL_SIZE)) if RESCALE_OUTPUT else 1.0

# Chebyshev-Lobatto nodes scaled by length/2 (length=2 -> nodes in [-1, 1])
CHEB_NODES = [(LENGTH / 2.0) * (-math.cos(k * math.pi / (N_POLY - 1)))
              for k in range(N_POLY)]


# ---------------- fused Pallas kernel: expansion + conv-transpose ----------------
def _make_fused_kernel(C, H, W):
    K = KERNEL_SIZE
    O = OUT_CHANNELS
    Wo = W + K - 1
    Ho = H + K - 1
    HWP = H * Wo                 # flattened width-padded input plane
    OUT_FLAT = Ho * Wo           # flattened output plane
    cin = C * BASIS
    half = LENGTH / 2.0
    segf = float(SEGMENTS)
    # Reciprocal Lagrange denominators are Python constants (trace-time folded).
    lag_inv = [[(1.0 / (CHEB_NODES[j] - CHEB_NODES[m]) if m != j else 0.0)
                for m in range(N_POLY)] for j in range(N_POLY)]

    def kernel(x_ref, w_ref, m_ref, o_ref, e_ref, acc_ref):
        # x_ref   : (C, HWP)        width-padded input image, flattened spatial
        # w_ref   : (K*K*O, cin)    weight rows ordered (p, q, o)-major,
        #                           columns ordered (basis-major, channel-minor)
        # m_ref   : (1, HWP)        1.0 on real columns, 0.0 on width-pad columns
        # o_ref   : (O, Ho*Wo)      flattened NCHW output for this batch element
        # e_ref   : (cin, HWP)      VMEM scratch: expanded activations
        # acc_ref : (O, OUT_FLAT + K - 1)  VMEM accumulator scratch
        x = x_ref[...]                                   # (C, HWP)
        mask = m_ref[...]                                # (1, HWP)

        # ---- piecewise segment id & local coordinate (all channels at once) ----
        id_min = jnp.clip(jnp.floor(((x + half) / LENGTH) * segf), 0.0, segf - 1.0)
        x_min = id_min / segf * 2.0 - 1.0
        x_max = (id_min + 1.0) / segf * 2.0 - 1.0
        x_in = LENGTH * (x - x_min) / (x_max - x_min) - half        # (C, HWP)

        # Lagrange values at the N_POLY local Chebyshev-Lobatto nodes
        lvals = []
        for j in range(N_POLY):
            lj = jnp.ones_like(x_in)
            for m in range(N_POLY):
                if m != j:
                    lj = lj * ((x_in - CHEB_NODES[m]) * lag_inv[j][m])
            lvals.append(lj)

        # Segment indicators with the width-pad mask folded in (the expansion
        # of the pad value 0 is NOT zero, so pad columns must be killed here).
        seg_ind = [jnp.where(id_min == float(s), 1.0, 0.0) * mask
                   for s in range(SEGMENTS)]

        # ---- assemble expanded activations: rows ordered b*C + c ----
        for b in range(BASIS):
            vb = None
            for s in range(SEGMENTS):
                j = b - s * (N_POLY - 1)
                if 0 <= j < N_POLY:
                    t = lvals[j] * seg_ind[s]
                    vb = t if vb is None else vb + t
            e_ref[b * C:(b + 1) * C, :] = vb

        # ---- conv-transpose: one MXU matmul + K*K shifted 1-D accumulations ----
        r = jnp.dot(w_ref[...], e_ref[...],
                    preferred_element_type=jnp.float32)              # (K*K*O, HWP)

        acc_ref[...] = jnp.zeros_like(acc_ref)
        for p in range(K):
            for q in range(K):
                idx = p * K + q
                off = p * Wo + q
                cur = acc_ref[:, off:off + HWP]
                acc_ref[:, off:off + HWP] = cur + r[idx * O:(idx + 1) * O, :]
        o_ref[...] = acc_ref[:, :OUT_FLAT]

    return kernel


# ---------------- forward pass ----------------
def forward(x_nchw, weight):
    """x_nchw: (N, C, H, W); weight: (CIN, OUT_CHANNELS, K, K) (torch ConvTranspose2d layout)."""
    N, C, H, W = x_nchw.shape
    K = KERNEL_SIZE
    O = OUT_CHANNELS
    Ho, Wo = H + K - 1, W + K - 1
    HWP = H * Wo
    OUT_FLAT = Ho * Wo
    LACC = OUT_FLAT + (K - 1)
    cin = C * BASIS

    # width-pad raw x by K-1 so flattened rows have stride Wo (tiny pad, free reshape)
    x_wpad = jnp.pad(x_nchw, ((0, 0), (0, 0), (0, 0), (0, K - 1)))
    x_flat = x_wpad.reshape(N, C, HWP).astype(jnp.float32)

    # torch weight index ci = c*BASIS + b.  Rows ordered (p, q, o)-major; columns
    # reordered (basis-major, channel-minor) to match in-kernel assembly of e.
    w5 = weight.reshape(C, BASIS, O, K, K)                 # [c, b, o, p, q]
    w_all = (jnp.transpose(w5, (3, 4, 2, 1, 0)).reshape(K * K * O, cin)
             * RESCALE).astype(jnp.float32)

    # validity mask for width-pad columns
    mask = ((jnp.arange(HWP, dtype=jnp.int32) % Wo) < W).astype(jnp.float32).reshape(1, HWP)

    kernel = _make_fused_kernel(C, H, W)
    out = pl.pallas_call(
        kernel,
        out_shape=jax.ShapeDtypeStruct((N, O, OUT_FLAT), jnp.float32),
        grid=(N,),
        in_specs=[
            pl.BlockSpec((None, C, HWP), lambda n: (n, 0, 0)),
            pl.BlockSpec((K * K * O, cin), lambda n: (0, 0)),
            pl.BlockSpec((1, HWP), lambda n: (0, 0)),
        ],
        out_specs=pl.BlockSpec((None, O, OUT_FLAT), lambda n: (n, 0, 0)),
        scratch_shapes=[pltpu.VMEM((cin, HWP), jnp.float32),
                        pltpu.VMEM((O, LACC), jnp.float32)],
        compiler_params=pltpu.CompilerParams(
            dimension_semantics=("parallel",),
            vmem_limit_bytes=32 * 1024 * 1024,
        ),
    )(x_flat, w_all, mask)
    return out.reshape(N, O, Ho, Wo)   # metadata-only reshape: output is already NCHW


# ---------------- pure-JAX reference (for correctness check only) ----------------
def reference_forward(x_nchw, weight):
    N, C, H, W = x_nchw.shape
    K = KERNEL_SIZE
    half = LENGTH / 2.0
    segf = float(SEGMENTS)
    x = x_nchw
    id_min = jnp.clip(jnp.floor(((x + half) / LENGTH) * segf), 0.0, segf - 1.0)
    x_min = id_min / segf * 2.0 - 1.0
    x_max = (id_min + 1.0) / segf * 2.0 - 1.0
    x_in = LENGTH * (x - x_min) / (x_max - x_min) - half
    wid_min = (id_min * (N_POLY - 1)).astype(jnp.int32)
    out = jnp.zeros((N, C, H, W, BASIS))
    b_iota = jnp.arange(BASIS)
    for j in range(N_POLY):
        lj = jnp.ones_like(x_in)
        for m in range(N_POLY):
            if m != j:
                lj = lj * (x_in - CHEB_NODES[m]) / (CHEB_NODES[j] - CHEB_NODES[m])
        out = out + jnp.where(
            b_iota[None, None, None, None, :] == (wid_min + j)[..., None],
            lj[..., None], 0.0)
    e = jnp.transpose(out, (0, 1, 4, 2, 3)).reshape(N, C * BASIS, H, W)
    Ho, Wo = H + K - 1, W + K - 1
    y = jnp.zeros((N, OUT_CHANNELS, Ho, Wo))
    for p in range(K):          # direct scatter-add definition of conv-transpose
        for q in range(K):
            contrib = jnp.einsum('nchw,co->nohw', e, weight[:, :, p, q],
                                 precision=jax.lax.Precision.HIGHEST)
            y = y.at[:, :, p:p + H, q:q + W].add(contrib)
    return y * RESCALE


if __name__ == "__main__":
    key = jax.random.PRNGKey(0)
    kx, kw = jax.random.split(key)
    N, H, W = 2, 16, 16
    x = jax.random.uniform(kx, (N, IN_CHANNELS, H, W), jnp.float32,
                           minval=-1.0, maxval=1.0)
    # conv_transpose_wrapper init: uniform(-1/in_features, 1/in_features), bias=False
    wmag = 1.0 / IN_FEATURES
    weight = jax.random.uniform(kw, (CIN, OUT_CHANNELS, KERNEL_SIZE, KERNEL_SIZE),
                                jnp.float32, minval=-wmag, maxval=wmag)

    y = jax.jit(forward)(x, weight)
    y = jax.block_until_ready(y)

    assert y.shape == (N, OUT_CHANNELS, H + KERNEL_SIZE - 1, W + KERNEL_SIZE - 1)
    y_ref = reference_forward(x, weight)
    assert jnp.allclose(y, y_ref, rtol=1e-3, atol=1e-5), \
        float(jnp.max(jnp.abs(y - y_ref)))
    print("KERNEL_OK")
</pallas_src>

<mosaic_0001>
module attributes {stable_mosaic.version = 11 : i64} {
  func.func @kernel(%arg0: i32, %arg1: memref<1x4x288xf32, #tpu.memory_space<vmem>>, %arg2: memref<36x20xf32, #tpu.memory_space<vmem>>, %arg3: memref<1x288xf32, #tpu.memory_space<vmem>>, %arg4: memref<1x4x324xf32, #tpu.memory_space<vmem>>, %arg5: memref<20x288xf32, #tpu.memory_space<vmem>>, %arg6: memref<4x326xf32, #tpu.memory_space<vmem>>) attributes {dimension_semantics = [#tpu.dimension_semantics<parallel>], iteration_bounds = array<i64: 2>, scalar_prefetch = 0 : i64, scratch_operands = 2 : i64, tpu.core_type = #tpu.core_type<tc>, window_params = [{transform_indices = @transform_0, window_bounds = array<i64: 1, 4, 288>}, {pipeline_mode = #tpu.pipeline_mode<synchronous>, transform_indices = @transform_1, window_bounds = array<i64: 36, 20>}, {pipeline_mode = #tpu.pipeline_mode<synchronous>, transform_indices = @transform_2, window_bounds = array<i64: 1, 288>}, {transform_indices = @transform_3, window_bounds = array<i64: 1, 4, 324>}]} {
    %c0 = arith.constant 0 : index
    %c0_0 = arith.constant 0 : index
    %c0_1 = arith.constant 0 : index
    %0 = vector.load %arg1[%c0, %c0_0, %c0_1] : memref<1x4x288xf32, #tpu.memory_space<vmem>>, vector<1x4x288xf32>
    %1 = vector.shape_cast %0 : vector<1x4x288xf32> to vector<4x288xf32>
    %c0_2 = arith.constant 0 : index
    %c0_3 = arith.constant 0 : index
    %2 = vector.load %arg3[%c0_2, %c0_3] : memref<1x288xf32, #tpu.memory_space<vmem>>, vector<1x288xf32>
    %cst = arith.constant 1.000000e+00 : f32
    %3 = vector.broadcast %cst : f32 to vector<4x288xf32>
    %4 = arith.addf %1, %3 : vector<4x288xf32>
    %cst_4 = arith.constant 2.000000e+00 : f32
    %5 = vector.broadcast %cst_4 : f32 to vector<4x288xf32>
    %6 = arith.divf %4, %5 : vector<4x288xf32>
    %cst_5 = arith.constant 2.000000e+00 : f32
    %7 = vector.broadcast %cst_5 : f32 to vector<4x288xf32>
    %8 = arith.mulf %6, %7 : vector<4x288xf32>
    %9 = math.floor %8 : vector<4x288xf32>
    %cst_6 = arith.constant 0.000000e+00 : f32
    %cst_7 = arith.constant 1.000000e+00 : f32
    %10 = vector.broadcast %cst_6 : f32 to vector<4x288xf32>
    %11 = arith.maximumf %10, %9 : vector<4x288xf32>
    %12 = vector.broadcast %cst_7 : f32 to vector<4x288xf32>
    %13 = arith.minimumf %12, %11 : vector<4x288xf32>
    %cst_8 = arith.constant 2.000000e+00 : f32
    %14 = vector.broadcast %cst_8 : f32 to vector<4x288xf32>
    %15 = arith.divf %13, %14 : vector<4x288xf32>
    %cst_9 = arith.constant 2.000000e+00 : f32
    %16 = vector.broadcast %cst_9 : f32 to vector<4x288xf32>
    %17 = arith.mulf %15, %16 : vector<4x288xf32>
    %cst_10 = arith.constant 1.000000e+00 : f32
    %18 = vector.broadcast %cst_10 : f32 to vector<4x288xf32>
    %19 = arith.subf %17, %18 : vector<4x288xf32>
    %cst_11 = arith.constant 1.000000e+00 : f32
    %20 = vector.broadcast %cst_11 : f32 to vector<4x288xf32>
    %21 = arith.addf %13, %20 : vector<4x288xf32>
    %cst_12 = arith.constant 2.000000e+00 : f32
    %22 = vector.broadcast %cst_12 : f32 to vector<4x288xf32>
    %23 = arith.divf %21, %22 : vector<4x288xf32>
    %cst_13 = arith.constant 2.000000e+00 : f32
    %24 = vector.broadcast %cst_13 : f32 to vector<4x288xf32>
    %25 = arith.mulf %23, %24 : vector<4x288xf32>
    %cst_14 = arith.constant 1.000000e+00 : f32
    %26 = vector.broadcast %cst_14 : f32 to vector<4x288xf32>
    %27 = arith.subf %25, %26 : vector<4x288xf32>
    %28 = arith.subf %1, %19 : vector<4x288xf32>
    %cst_15 = arith.constant 2.000000e+00 : f32
    %29 = vector.broadcast %cst_15 : f32 to vector<4x288xf32>
    %30 = arith.mulf %29, %28 : vector<4x288xf32>
    %31 = arith.subf %27, %19 : vector<4x288xf32>
    %32 = arith.divf %30, %31 : vector<4x288xf32>
    %cst_16 = arith.constant 1.000000e+00 : f32
    %33 = vector.broadcast %cst_16 : f32 to vector<4x288xf32>
    %34 = arith.subf %32, %33 : vector<4x288xf32>
    %cst_17 = arith.constant 1.000000e+00 : f32
    %35 = vector.broadcast %cst_17 : f32 to vector<4x288xf32>
    %cst_18 = arith.constant -6.12323426E-17 : f32
    %36 = vector.broadcast %cst_18 : f32 to vector<4x288xf32>
    %37 = arith.subf %34, %36 : vector<4x288xf32>
    %cst_19 = arith.constant -1.000000e+00 : f32
    %38 = vector.broadcast %cst_19 : f32 to vector<4x288xf32>
    %39 = arith.mulf %37, %38 : vector<4x288xf32>
    %40 = arith.mulf %35, %39 : vector<4x288xf32>
    %cst_20 = arith.constant 1.000000e+00 : f32
    %41 = vector.broadcast %cst_20 : f32 to vector<4x288xf32>
    %42 = arith.subf %34, %41 : vector<4x288xf32>
    %cst_21 = arith.constant -5.000000e-01 : f32
    %43 = vector.broadcast %cst_21 : f32 to vector<4x288xf32>
    %44 = arith.mulf %42, %43 : vector<4x288xf32>
    %45 = arith.mulf %40, %44 : vector<4x288xf32>
    %cst_22 = arith.constant 1.000000e+00 : f32
    %46 = vector.broadcast %cst_22 : f32 to vector<4x288xf32>
    %cst_23 = arith.constant -1.000000e+00 : f32
    %47 = vector.broadcast %cst_23 : f32 to vector<4x288xf32>
    %48 = arith.subf %34, %47 : vector<4x288xf32>
    %cst_24 = arith.constant 1.000000e+00 : f32
    %49 = vector.broadcast %cst_24 : f32 to vector<4x288xf32>
    %50 = arith.mulf %48, %49 : vector<4x288xf32>
    %51 = arith.mulf %46, %50 : vector<4x288xf32>
    %cst_25 = arith.constant 1.000000e+00 : f32
    %52 = vector.broadcast %cst_25 : f32 to vector<4x288xf32>
    %53 = arith.subf %34, %52 : vector<4x288xf32>
    %cst_26 = arith.constant -1.000000e+00 : f32
    %54 = vector.broadcast %cst_26 : f32 to vector<4x288xf32>
    %55 = arith.mulf %53, %54 : vector<4x288xf32>
    %56 = arith.mulf %51, %55 : vector<4x288xf32>
    %cst_27 = arith.constant 1.000000e+00 : f32
    %57 = vector.broadcast %cst_27 : f32 to vector<4x288xf32>
    %cst_28 = arith.constant -1.000000e+00 : f32
    %58 = vector.broadcast %cst_28 : f32 to vector<4x288xf32>
    %59 = arith.subf %34, %58 : vector<4x288xf32>
    %cst_29 = arith.constant 5.000000e-01 : f32
    %60 = vector.broadcast %cst_29 : f32 to vector<4x288xf32>
    %61 = arith.mulf %59, %60 : vector<4x288xf32>
    %62 = arith.mulf %57, %61 : vector<4x288xf32>
    %cst_30 = arith.constant -6.12323426E-17 : f32
    %63 = vector.broadcast %cst_30 : f32 to vector<4x288xf32>
    %64 = arith.subf %34, %63 : vector<4x288xf32>
    %cst_31 = arith.constant 1.000000e+00 : f32
    %65 = vector.broadcast %cst_31 : f32 to vector<4x288xf32>
    %66 = arith.mulf %64, %65 : vector<4x288xf32>
    %67 = arith.mulf %62, %66 : vector<4x288xf32>
    %cst_32 = arith.constant 0.000000e+00 : f32
    %68 = vector.broadcast %cst_32 : f32 to vector<4x288xf32>
    %69 = arith.cmpf oeq, %13, %68 : vector<4x288xf32>
    %cst_33 = arith.constant 1.000000e+00 : f32
    %cst_34 = arith.constant 0.000000e+00 : f32
    %70 = vector.broadcast %cst_33 : f32 to vector<4x288xf32>
    %71 = vector.broadcast %cst_34 : f32 to vector<4x288xf32>
    %72 = arith.select %69, %70, %71 : vector<4x288xi1>, vector<4x288xf32>
    %73 = vector.broadcast %2 : vector<1x288xf32> to vector<4x288xf32>
    %74 = arith.mulf %72, %73 : vector<4x288xf32>
    %cst_35 = arith.constant 1.000000e+00 : f32
    %75 = vector.broadcast %cst_35 : f32 to vector<4x288xf32>
    %76 = arith.cmpf oeq, %13, %75 : vector<4x288xf32>
    %cst_36 = arith.constant 1.000000e+00 : f32
    %cst_37 = arith.constant 0.000000e+00 : f32
    %77 = vector.broadcast %cst_36 : f32 to vector<4x288xf32>
    %78 = vector.broadcast %cst_37 : f32 to vector<4x288xf32>
    %79 = arith.select %76, %77, %78 : vector<4x288xi1>, vector<4x288xf32>
    %80 = vector.broadcast %2 : vector<1x288xf32> to vector<4x288xf32>
    %81 = arith.mulf %79, %80 : vector<4x288xf32>
    %82 = arith.mulf %45, %74 : vector<4x288xf32>
    %c0_38 = arith.constant 0 : index
    %c0_39 = arith.constant 0 : index
    %83 = vector.load %arg5[%c0_38, %c0_39] : memref<20x288xf32, #tpu.memory_space<vmem>>, vector<4x288xf32>
    tpu.vector_store %arg5[%c0_38, %c0_39], %82 {strides = array<i32>} : memref<20x288xf32, #tpu.memory_space<vmem>>, vector<4x288xf32>,
    %84 = arith.mulf %56, %74 : vector<4x288xf32>
    %c4 = arith.constant 4 : index
    %c0_40 = arith.constant 0 : index
    %85 = vector.load %arg5[%c4, %c0_40] : memref<20x288xf32, #tpu.memory_space<vmem>>, vector<4x288xf32>
    tpu.vector_store %arg5[%c4, %c0_40], %84 {strides = array<i32>} : memref<20x288xf32, #tpu.memory_space<vmem>>, vector<4x288xf32>,
    %86 = arith.mulf %67, %74 : vector<4x288xf32>
    %87 = arith.mulf %45, %81 : vector<4x288xf32>
    %88 = arith.addf %86, %87 : vector<4x288xf32>
    %c8 = arith.constant 8 : index
    %c0_41 = arith.constant 0 : index
    %89 = vector.load %arg5[%c8, %c0_41] : memref<20x288xf32, #tpu.memory_space<vmem>>, vector<4x288xf32>
    tpu.vector_store %arg5[%c8, %c0_41], %88 {strides = array<i32>} : memref<20x288xf32, #tpu.memory_space<vmem>>, vector<4x288xf32>,
    %90 = arith.mulf %56, %81 : vector<4x288xf32>
    %c12 = arith.constant 12 : index
    %c0_42 = arith.constant 0 : index
    %91 = vector.load %arg5[%c12, %c0_42] : memref<20x288xf32, #tpu.memory_space<vmem>>, vector<4x288xf32>
    tpu.vector_store %arg5[%c12, %c0_42], %90 {strides = array<i32>} : memref<20x288xf32, #tpu.memory_space<vmem>>, vector<4x288xf32>,
    %92 = arith.mulf %67, %81 : vector<4x288xf32>
    %c16 = arith.constant 16 : index
    %c0_43 = arith.constant 0 : index
    %93 = vector.load %arg5[%c16, %c0_43] : memref<20x288xf32, #tpu.memory_space<vmem>>, vector<4x288xf32>
    tpu.vector_store %arg5[%c16, %c0_43], %92 {strides = array<i32>} : memref<20x288xf32, #tpu.memory_space<vmem>>, vector<4x288xf32>,
    %c0_44 = arith.constant 0 : index
    %c0_45 = arith.constant 0 : index
    %94 = vector.load %arg2[%c0_44, %c0_45] : memref<36x20xf32, #tpu.memory_space<vmem>>, vector<36x20xf32>
    %c0_46 = arith.constant 0 : index
    %c0_47 = arith.constant 0 : index
    %95 = vector.load %arg5[%c0_46, %c0_47] : memref<20x288xf32, #tpu.memory_space<vmem>>, vector<20x288xf32>
    %cst_48 = arith.constant dense<0.000000e+00> : vector<36x288xf32>
    %96 = tpu.matmul %94, %95, %cst_48 {dimension_numbers = #tpu.dot_dimension_numbers<[1], [0], [0], [1], [0, 0, 1, 1], [], []>} : vector<36x20xf32>, vector<20x288xf32>, vector<36x288xf32> -> vector<36x288xf32>
    %cst_49 = arith.constant 0.000000e+00 : f32
    %97 = vector.broadcast %cst_49 : f32 to vector<4x326xf32>
    %c0_50 = arith.constant 0 : index
    %c0_51 = arith.constant 0 : index
    %98 = vector.load %arg6[%c0_50, %c0_51] : memref<4x326xf32, #tpu.memory_space<vmem>>, vector<4x326xf32>
    tpu.vector_store %arg6[%c0_50, %c0_51], %97 {strides = array<i32>} : memref<4x326xf32, #tpu.memory_space<vmem>>, vector<4x326xf32>,
    %c0_52 = arith.constant 0 : index
    %c0_53 = arith.constant 0 : index
    %99 = vector.load %arg6[%c0_52, %c0_53] : memref<4x326xf32, #tpu.memory_space<vmem>>, vector<4x288xf32>
    %100 = vector.extract_strided_slice %96 {offsets = [0, 0], sizes = [4, 288], strides = [1, 1]} : vector<36x288xf32> to vector<4x288xf32>
    %101 = arith.addf %99, %100 : vector<4x288xf32>
    %c0_54 = arith.constant 0 : index
    %c0_55 = arith.constant 0 : index
    %102 = vector.load %arg6[%c0_54, %c0_55] : memref<4x326xf32, #tpu.memory_space<vmem>>, vector<4x288xf32>
    tpu.vector_store %arg6[%c0_54, %c0_55], %101 {strides = array<i32>} : memref<4x326xf32, #tpu.memory_space<vmem>>, vector<4x288xf32>,
    %c0_56 = arith.constant 0 : index
    %c1 = arith.constant 1 : index
    %103 = vector.load %arg6[%c0_56, %c1] : memref<4x326xf32, #tpu.memory_space<vmem>>, vector<4x288xf32>
    %104 = vector.extract_strided_slice %96 {offsets = [4, 0], sizes = [4, 288], strides = [1, 1]} : vector<36x288xf32> to vector<4x288xf32>
    %105 = arith.addf %103, %104 : vector<4x288xf32>
    %c0_57 = arith.constant 0 : index
    %c1_58 = arith.constant 1 : index
    %106 = vector.load %arg6[%c0_57, %c1_58] : memref<4x326xf32, #tpu.memory_space<vmem>>, vector<4x288xf32>
    tpu.vector_store %arg6[%c0_57, %c1_58], %105 {strides = array<i32>} : memref<4x326xf32, #tpu.memory_space<vmem>>, vector<4x288xf32>,
    %c0_59 = arith.constant 0 : index
    %c2 = arith.constant 2 : index
    %107 = vector.load %arg6[%c0_59, %c2] : memref<4x326xf32, #tpu.memory_space<vmem>>, vector<4x288xf32>
    %108 = vector.extract_strided_slice %96 {offsets = [8, 0], sizes = [4, 288], strides = [1, 1]} : vector<36x288xf32> to vector<4x288xf32>
    %109 = arith.addf %107, %108 : vector<4x288xf32>
    %c0_60 = arith.constant 0 : index
    %c2_61 = arith.constant 2 : index
    %110 = vector.load %arg6[%c0_60, %c2_61] : memref<4x326xf32, #tpu.memory_space<vmem>>, vector<4x288xf32>
    tpu.vector_store %arg6[%c0_60, %c2_61], %109 {strides = array<i32>} : memref<4x326xf32, #tpu.memory_space<vmem>>, vector<4x288xf32>,
    %c0_62 = arith.constant 0 : index
    %c18 = arith.constant 18 : index
    %111 = vector.load %arg6[%c0_62, %c18] : memref<4x326xf32, #tpu.memory_space<vmem>>, vector<4x288xf32>
    %112 = vector.extract_strided_slice %96 {offsets = [12, 0], sizes = [4, 288], strides = [1, 1]} : vector<36x288xf32> to vector<4x288xf32>
    %113 = arith.addf %111, %112 : vector<4x288xf32>
    %c0_63 = arith.constant 0 : index
    %c18_64 = arith.constant 18 : index
    %114 = vector.load %arg6[%c0_63, %c18_64] : memref<4x326xf32, #tpu.memory_space<vmem>>, vector<4x288xf32>
    tpu.vector_store %arg6[%c0_63, %c18_64], %113 {strides = array<i32>} : memref<4x326xf32, #tpu.memory_space<vmem>>, vector<4x288xf32>,
    %c0_65 = arith.constant 0 : index
    %c19 = arith.constant 19 : index
    %115 = vector.load %arg6[%c0_65, %c19] : memref<4x326xf32, #tpu.memory_space<vmem>>, vector<4x288xf32>
    %116 = vector.extract_strided_slice %96 {offsets = [16, 0], sizes = [4, 288], strides = [1, 1]} : vector<36x288xf32> to vector<4x288xf32>
    %117 = arith.addf %115, %116 : vector<4x288xf32>
    %c0_66 = arith.constant 0 : index
    %c19_67 = arith.constant 19 : index
    %118 = vector.load %arg6[%c0_66, %c19_67] : memref<4x326xf32, #tpu.memory_space<vmem>>, vector<4x288xf32>
    tpu.vector_store %arg6[%c0_66, %c19_67], %117 {strides = array<i32>} : memref<4x326xf32, #tpu.memory_space<vmem>>, vector<4x288xf32>,
    %c0_68 = arith.constant 0 : index
    %c20 = arith.constant 20 : index
    %119 = vector.load %arg6[%c0_68, %c20] : memref<4x326xf32, #tpu.memory_space<vmem>>, vector<4x288xf32>
    %120 = vector.extract_strided_slice %96 {offsets = [20, 0], sizes = [4, 288], strides = [1, 1]} : vector<36x288xf32> to vector<4x288xf32>
    %121 = arith.addf %119, %120 : vector<4x288xf32>
    %c0_69 = arith.constant 0 : index
    %c20_70 = arith.constant 20 : index
    %122 = vector.load %arg6[%c0_69, %c20_70] : memref<4x326xf32, #tpu.memory_space<vmem>>, vector<4x288xf32>
    tpu.vector_store %arg6[%c0_69, %c20_70], %121 {strides = array<i32>} : memref<4x326xf32, #tpu.memory_space<vmem>>, vector<4x288xf32>,
    %c0_71 = arith.constant 0 : index
    %c36 = arith.constant 36 : index
    %123 = vector.load %arg6[%c0_71, %c36] : memref<4x326xf32, #tpu.memory_space<vmem>>, vector<4x288xf32>
    %124 = vector.extract_strided_slice %96 {offsets = [24, 0], sizes = [4, 288], strides = [1, 1]} : vector<36x288xf32> to vector<4x288xf32>
    %125 = arith.addf %123, %124 : vector<4x288xf32>
    %c0_72 = arith.constant 0 : index
    %c36_73 = arith.constant 36 : index
    %126 = vector.load %arg6[%c0_72, %c36_73] : memref<4x326xf32, #tpu.memory_space<vmem>>, vector<4x288xf32>
    tpu.vector_store %arg6[%c0_72, %c36_73], %125 {strides = array<i32>} : memref<4x326xf32, #tpu.memory_space<vmem>>, vector<4x288xf32>,
    %c0_74 = arith.constant 0 : index
    %c37 = arith.constant 37 : index
    %127 = vector.load %arg6[%c0_74, %c37] : memref<4x326xf32, #tpu.memory_space<vmem>>, vector<4x288xf32>
    %128 = vector.extract_strided_slice %96 {offsets = [28, 0], sizes = [4, 288], strides = [1, 1]} : vector<36x288xf32> to vector<4x288xf32>
    %129 = arith.addf %127, %128 : vector<4x288xf32>
    %c0_75 = arith.constant 0 : index
    %c37_76 = arith.constant 37 : index
    %130 = vector.load %arg6[%c0_75, %c37_76] : memref<4x326xf32, #tpu.memory_space<vmem>>, vector<4x288xf32>
    tpu.vector_store %arg6[%c0_75, %c37_76], %129 {strides = array<i32>} : memref<4x326xf32, #tpu.memory_space<vmem>>, vector<4x288xf32>,
    %c0_77 = arith.constant 0 : index
    %c38 = arith.constant 38 : index
    %131 = vector.load %arg6[%c0_77, %c38] : memref<4x326xf32, #tpu.memory_space<vmem>>, vector<4x288xf32>
    %132 = vector.extract_strided_slice %96 {offsets = [32, 0], sizes = [4, 288], strides = [1, 1]} : vector<36x288xf32> to vector<4x288xf32>
    %133 = arith.addf %131, %132 : vector<4x288xf32>
    %c0_78 = arith.constant 0 : index
    %c38_79 = arith.constant 38 : index
    %134 = vector.load %arg6[%c0_78, %c38_79] : memref<4x326xf32, #tpu.memory_space<vmem>>, vector<4x288xf32>
    tpu.vector_store %arg6[%c0_78, %c38_79], %133 {strides = array<i32>} : memref<4x326xf32, #tpu.memory_space<vmem>>, vector<4x288xf32>,
    %c0_80 = arith.constant 0 : index
    %c0_81 = arith.constant 0 : index
    %135 = vector.load %arg6[%c0_80, %c0_81] : memref<4x326xf32, #tpu.memory_space<vmem>>, vector<4x324xf32>
    %c0_82 = arith.constant 0 : index
    %c0_83 = arith.constant 0 : index
    %c0_84 = arith.constant 0 : index
    %136 = vector.load %arg4[%c0_82, %c0_83, %c0_84] : memref<1x4x324xf32, #tpu.memory_space<vmem>>, vector<1x4x324xf32>
    %137 = vector.shape_cast %136 : vector<1x4x324xf32> to vector<4x324xf32>
    %138 = vector.shape_cast %135 : vector<4x324xf32> to vector<1x4x324xf32>
    tpu.vector_store %arg4[%c0_82, %c0_83, %c0_84], %138 {strides = array<i32>} : memref<1x4x324xf32, #tpu.memory_space<vmem>>, vector<1x4x324xf32>,
    return
  }
  func.func @transform_0(%arg0: i32) -> (i32, i32, i32) {
    %c0_i32 = arith.constant 0 : i32
    %c0_i32_0 = arith.constant 0 : i32
    %c0_i32_1 = arith.constant 0 : i32
    return %arg0, %c0_i32, %c0_i32_0 : i32, i32, i32
  }
  func.func @transform_1(%arg0: i32) -> (i32, i32) {
    %c0_i32 = arith.constant 0 : i32
    %c0_i32_0 = arith.constant 0 : i32
    %c0_i32_1 = arith.constant 0 : i32
    return %c0_i32, %c0_i32_0 : i32, i32
  }
  func.func @transform_2(%arg0: i32) -> (i32, i32) {
    %c0_i32 = arith.constant 0 : i32
    %c0_i32_0 = arith.constant 0 : i32
    %c0_i32_1 = arith.constant 0 : i32
    return %c0_i32, %c0_i32_0 : i32, i32
  }
  func.func @transform_3(%arg0: i32) -> (i32, i32, i32) {
    %c0_i32 = arith.constant 0 : i32
    %c0_i32_0 = arith.constant 0 : i32
    %c0_i32_1 = arith.constant 0 : i32
    return %arg0, %c0_i32, %c0_i32_0 : i32, i32, i32
  }
}

</mosaic_0001>

<llo_original>
// kernel: forward.1
$region0: #{forward.1}
  #allocation0 [shape = 'u32[]', space=smem, size = 0x4, offset = 0x4, fixed_abs, tag = 'smem constant byte address 0x4 - core index']
  #allocation1 [shape = 'u32[144,128]{1,0:T(1,128)}', space=vmem, size = 0x12000, scoped, tag = 'internal scratch']
  #allocation2 [shape = 'f32[20,288]{1,0:T(8,128)}', space=vmem, size = 0x9000, scoped, tag = 'scratch operand']
  #allocation3 [shape = 'f32[4,326]{1,0:T(4,128)}', space=vmem, size = 0x1800, scoped, tag = 'scratch operand']
  %s0 = inlined_call_operand.vmem [shape: f32[2,4,288], index: 0, kind: input, shape index: {}]
  %s1 = inlined_call_operand.vmem [shape: f32[36,20], index: 1, kind: input, shape index: {}]
  %s2 = inlined_call_operand.vmem [shape: f32[1,288], index: 2, kind: input, shape index: {}]
  %s3 = inlined_call_operand.vmem [shape: f32[2,4,324], index: 3, kind: output, shape index: {}]
  %s4 = sld [smem:[#allocation0]]
  $region45: #{forward.1} parent=0
    _
  %s6 = ssub.s32 1, %s4
  %s7 = scalar_select 0, %s6, %s4
  loop: start=0, step=1, limit=4
  $region2: #{forward.1} parent=0 // loop_pre_header
    _
  $region3: #{forward.1} parent=0 // loop_header
    %s9 = sphi 0, %s13
    %p10 = scmp.ge.s32.totalorder %s9, 4
    %s19 = sphi 0, %s21
    %s22 = sphi 0, %s19
    %s23 = sphi 0, %s22
    %s39 = sphi 0, %s23
    %s43 = sphi 0, %s43
    %s45 = sphi 0, %s43
    %s46 = sphi 0, %s45
    %s60 = sphi 0, %s46
    %s64 = sphi 0, %s64
    %s66 = sphi 0, %s64
    %s67 = sphi 0, %s66
    %s81 = sphi 0, %s67
    %s87 = sphi 0, %s89
    %s90 = sphi 0, %s87
    %s91 = sphi 0, %s90
    %s107 = sphi 0, %s91
  $region4: #{forward.1} parent=0 // loop_header_branch
    %12 = sbr.rel (%p10) target = $region8
  $region5: #{forward.1} parent=0 // loop_body
    %s14 = ssub.s32 %s9, 1
    %s15 = ssub.s32 %s9, 2
    %s16 = sadd.s32 %s9, 1
    %s17 = ssub.s32 %s9, %s16
    %p18 = scmp.eq.s32.totalorder %s17, 0
    %s20 = sadd.s32 %s19, 1
    %s21 = scalar_select %p18, %s19, %s20
    %p24 = pneg %p18
    %p25 = scmp.eq.s32.totalorder %s9, 1
    %p26 = por %p24, %p25
    %p27 = scmp.ne.s32.totalorder %s19, %s22
    %p28 = scmp.eq.s32.totalorder %s9, 0
    %p29 = por %p27, %p28
    %p30 = scmp.ne.s32.totalorder %s19, %s22
    %p31 = scmp.eq.s32.totalorder %s14, 1
    %p32 = por %p30, %p31
    %p33 = scmp.ne.s32.totalorder %s22, %s23
    %p34 = scmp.eq.s32.totalorder %s14, 0
    %p35 = por %p33, %p34
    %p36 = scmp.ne.s32.totalorder %s22, %s23
    %p37 = scmp.eq.s32.totalorder %s15, 1
    %p38 = por %p36, %p37
    %p40 = scmp.ne.s32.totalorder %s23, %s39
    %p41 = scmp.eq.s32.totalorder %s15, 0
    %p42 = por %p40, %p41
    %s44 = sadd.s32 %s43, 1
    %p47 = scmp.eq.s32.totalorder %s9, 1
    %p48 = scmp.ne.s32.totalorder %s43, %s45
    %p49 = scmp.eq.s32.totalorder %s9, 0
    %p50 = por %p48, %p49
    %p51 = scmp.ne.s32.totalorder %s43, %s45
    %p52 = scmp.eq.s32.totalorder %s14, 1
    %p53 = por %p51, %p52
    %p54 = scmp.ne.s32.totalorder %s45, %s46
    %p55 = scmp.eq.s32.totalorder %s14, 0
    %p56 = por %p54, %p55
    %p57 = scmp.ne.s32.totalorder %s45, %s46
    %p58 = scmp.eq.s32.totalorder %s15, 1
    %p59 = por %p57, %p58
    %p61 = scmp.ne.s32.totalorder %s46, %s60
    %p62 = scmp.eq.s32.totalorder %s15, 0
    %p63 = por %p61, %p62
    %s65 = sadd.s32 %s64, 1
    %p68 = scmp.eq.s32.totalorder %s9, 1
    %p69 = scmp.ne.s32.totalorder %s64, %s66
    %p70 = scmp.eq.s32.totalorder %s9, 0
    %p71 = por %p69, %p70
    %p72 = scmp.ne.s32.totalorder %s64, %s66
    %p73 = scmp.eq.s32.totalorder %s14, 1
    %p74 = por %p72, %p73
    %p75 = scmp.ne.s32.totalorder %s66, %s67
    %p76 = scmp.eq.s32.totalorder %s14, 0
    %p77 = por %p75, %p76
    %p78 = scmp.ne.s32.totalorder %s66, %s67
    %p79 = scmp.eq.s32.totalorder %s15, 1
    %p80 = por %p78, %p79
    %p82 = scmp.ne.s32.totalorder %s67, %s81
    %p83 = scmp.eq.s32.totalorder %s15, 0
    %p84 = por %p82, %p83
    %s85 = ssub.s32 %s9, %s16
    %p86 = scmp.eq.s32.totalorder %s85, 0
    %s88 = sadd.s32 %s87, 1
    %s89 = scalar_select %p86, %s87, %s88
    %p92 = pneg %p86
    %p93 = scmp.eq.s32.totalorder %s9, 1
    %p94 = por %p92, %p93
    %p95 = scmp.ne.s32.totalorder %s87, %s90
    %p96 = scmp.eq.s32.totalorder %s9, 0
    %p97 = por %p95, %p96
    %p98 = scmp.ne.s32.totalorder %s87, %s90
    %p99 = scmp.eq.s32.totalorder %s14, 1
    %p100 = por %p98, %p99
    %p101 = scmp.ne.s32.totalorder %s90, %s91
    %p102 = scmp.eq.s32.totalorder %s14, 0
    %p103 = por %p101, %p102
    %p104 = scmp.ne.s32.totalorder %s90, %s91
    %p105 = scmp.eq.s32.totalorder %s15, 1
    %p106 = por %p104, %p105
    %p108 = scmp.ne.s32.totalorder %s91, %s107
    %p109 = scmp.eq.s32.totalorder %s15, 0
    %p110 = por %p108, %p109
    %p111 = scmp.le.s32.totalorder 1, %s9
    %p112 = scmp.lt.s32.totalorder %s9, 3
    %p113 = pnand %p111, %p112
    %p114 = pneg %p113
    // Predicated region
    $region9: #{forward.1} parent=5 // pred_check
      _
    $region10: #{forward.1} parent=5 // pred_check_branch
      %116 = sbr.rel (%p113) target = $region12
    $region11: #{forward.1} parent=5 // pred_region
      %s117 = ssub.s32 %s9, 1
      // Predicated region
      $region13: #{forward.1} parent=11 // pred_check
        %p118 = pneg %p56
      $region14: #{forward.1} parent=11 // pred_check_branch
        %120 = sbr.rel (%p118) target = $region16
      $region15: #{forward.1} parent=11 // pred_region
        _
      $region16: #{forward.1} parent=11 // pred_fallthru
        _
      // Predicated region
      $region17: #{forward.1} parent=11 // pred_check
        %p121 = pneg %p77
      $region18: #{forward.1} parent=11 // pred_check_branch
        %123 = sbr.rel (%p121) target = $region20
      $region19: #{forward.1} parent=11 // pred_region
        _
      $region20: #{forward.1} parent=11 // pred_fallthru
        _
    $region12: #{forward.1} parent=5 // pred_fallthru
      _
    %p124 = scmp.lt.s32.totalorder %s9, 2
    // Predicated region
    $region21: #{forward.1} parent=5 // pred_check
      %p125 = pneg %p124
    $region22: #{forward.1} parent=5 // pred_check_branch
      %127 = sbr.rel (%p125) target = $region24
    $region23: #{forward.1} parent=5 // pred_region
      // Predicated region
      $region25: #{forward.1} parent=23 // pred_check
        %p128 = pneg %p29
      $region26: #{forward.1} parent=23 // pred_check_branch
        %130 = sbr.rel (%p128) target = $region28
      $region27: #{forward.1} parent=23 // pred_region
        %p131 = scmp.lt.s32.totalorder %s9, 1
        %s132 = scalar_select %p131, %s9, 1
        %s133 = smul.addr %s132, 3
        %s134 = smul.addr %s133, 4
        %s135 = scalar_lea.vmem %s0, %s134
      $region28: #{forward.1} parent=23 // pred_fallthru
        _
    $region24: #{forward.1} parent=5 // pred_fallthru
      _
    %p136 = scmp.le.s32.totalorder 1, %s9
    %p137 = scmp.lt.s32.totalorder %s9, 3
    %p138 = pnand %p136, %p137
    %p139 = pneg %p138
    // Predicated region
    $region29: #{forward.1} parent=5 // pred_check
      _
    $region30: #{forward.1} parent=5 // pred_check_branch
      %141 = sbr.rel (%p138) target = $region32
    $region31: #{forward.1} parent=5 // pred_region
      %s142 = ssub.s32 %s9, 1
      %p143 = scmp.lt.s32.totalorder %s14, 1
      %s144 = scalar_select %p143, %s14, 1
      %s145 = smul.addr %s144, 3
      %s146 = smul.addr %s145, 4
      %s147 = scalar_lea.vmem %s0, %s146
      %p148 = pneg %p35
      %p149 = pneg %p32
      %p150 = pneg %p56
      %p151 = pneg %p53
      %p152 = pneg %p77
      %p153 = pneg %p74
      %p154 = pneg %p103
      %p155 = pneg %p100
      %p156 = scmp.lt.s32.totalorder %s14, 1
      %s157 = scalar_select %p156, %s14, 1
      %s158 = smul.addr %s157, 3
      %s159 = smul.addr %s158, 4
      %s160 = scalar_lea.vmem %s3, %s159
      %p161 = scmp.lt.s32.totalorder %s14, 1
      %s162 = scalar_select %p161, %s14, 1
      %s163 = smul.addr %s162, 3
      %s164 = smul.addr %s163, 4
      %s165 = scalar_lea.vmem %s0, %s164
      %p166 = scmp.lt.s32.totalorder %s14, 1
      %s167 = scalar_select %p166, %s14, 1
      %s168 = smul.addr %s167, 3
      %s169 = smul.addr %s168, 4
      %s170 = scalar_lea.vmem %s3, %s169
      %v171 = vld [vmem:[%s165] sm:$0xff]
      %v172 = vld [vmem:[%s165 + $0x8] sm:$0xf]
      %v173 = vld [vmem:[%s2] sm:$0x7]
      %v174 = vadd.f32 %v171, 1.0
      %v175 = vadd.f32 %v172, 1.0
      %v176 = vrcp.pop 2.0
      %v177 = vmul.f32 %v174, %v176
      %v178 = vmul.f32 %v175, %v176
      %v179 = vmul.f32 %v177, 2.0
      %v180 = vmul.f32 %v178, 2.0
      %v181 = vfloor.f32 %v179
      %v182 = vfloor.f32 %v180
      %v183 = vmax.f32 %v181, 0.0
      %v184 = vmax.f32 %v182, 0.0
      %v185 = vmin.f32 %v183, 1.0
      %v186 = vmin.f32 %v184, 1.0
      %v187 = vmul.f32 %v185, %v176
      %v188 = vmul.f32 %v186, %v176
      %v189 = vmul.f32 %v187, 2.0
      %v190 = vmul.f32 %v188, 2.0
      %v191 = vsub.f32 %v189, 1.0
      %v192 = vsub.f32 %v190, 1.0
      %v193 = vadd.f32 %v185, 1.0
      %v194 = vadd.f32 %v186, 1.0
      %v195 = vmul.f32 %v193, %v176
      %v196 = vmul.f32 %v194, %v176
      %v197 = vmul.f32 %v195, 2.0
      %v198 = vmul.f32 %v196, 2.0
      %v199 = vsub.f32 %v197, 1.0
      %v200 = vsub.f32 %v198, 1.0
      %v201 = vsub.f32 %v171, %v191
      %v202 = vsub.f32 %v172, %v192
      %v203 = vmul.f32 %v201, 2.0
      %v204 = vmul.f32 %v202, 2.0
      %v205 = vsub.f32 %v199, %v191
      %v206 = vsub.f32 %v200, %v192
      %v207 = vrcp.pop %v205
      %v208 = vmul.f32 %v203, %v207
      %v209 = vrcp.pop %v206
      %v210 = vmul.f32 %v204, %v209
      %v211 = vsub.f32 %v208, 1.0
      %v212 = vsub.f32 %v210, 1.0
      %v213 = vsub.f32 %v211, -6.123234e-17
      %v214 = vsub.f32 %v212, -6.123234e-17
      %v215 = vmul.f32 %v213, -1.0
      %v216 = vmul.f32 %v214, -1.0
      %v217 = vsub.f32 %v211, 1.0
      %v218 = vsub.f32 %v212, 1.0
      %v219 = vmul.f32 %v217, -0.5
      %v220 = vmul.f32 %v218, -0.5
      %v221 = vmul.f32 %v215, %v219
      %v222 = vmul.f32 %v216, %v220
      %v223 = vsub.f32 %v211, -1.0
      %v224 = vsub.f32 %v212, -1.0
      %v225 = vmul.f32 %v217, -1.0
      %v226 = vmul.f32 %v218, -1.0
      %v227 = vmul.f32 %v223, %v225
      %v228 = vmul.f32 %v224, %v226
      %v229 = vmul.f32 %v223, 0.5
      %v230 = vmul.f32 %v224, 0.5
      %v231 = vmul.f32 %v229, %v213
      %v232 = vmul.f32 %v230, %v214
      %vm233 = vcmp.eq.f32.partialorder %v185, 0.0
      %vm234 = vcmp.eq.f32.partialorder %v186, 0.0
      %v235 = vsel %vm233, 1.0, 0.0
      %v236 = vsel %vm234, 1.0, 0.0
      %v238 = vlaneseq
      %v239 = vshrl.u32 %v238, 7
      %v240 = vsub.s32 0, %v239
      %v241 = vrot.slane %v173, %v240
      %v242 = vlaneseq
      %v243 = vshrl.u32 %v242, 7
      %v244 = vsub.s32 1, %v243
      %v245 = vrot.slane %v173, %v244
      %v246 = vlaneseq
      %v247 = vshrl.u32 %v246, 7
      %v248 = vsub.s32 2, %v247
      %v249 = vrot.slane %v173, %v248
      %v251 = vcombine.low %v241, %v245
      %v253 = vmul.f32 %v235, %v251
      %v254 = vmul.f32 %v236, %v249
      %vm255 = vcmp.eq.f32.partialorder %v185, 1.0
      %vm256 = vcmp.eq.f32.partialorder %v186, 1.0
      %v257 = vsel %vm255, 1.0, 0.0
      %v258 = vsel %vm256, 1.0, 0.0
      %v259 = vmul.f32 %v257, %v251
      %v260 = vmul.f32 %v258, %v249
      %v261 = vmul.f32 %v221, %v253
      %v262 = vmul.f32 %v222, %v254
      %v264 = vcombine.high %v261, %v261
      %266 = vst [vmem:[#allocation2] sm:$0xf] %v261
      %267 = vst [vmem:[#allocation2 + $0x8] sm:$0xf] %v264
      %vm268 = vcmask 257024
      %269 = vst.msk [vmem:[#allocation2 + $0x10] sm:$0xf] %vm268, %v262
      %v270 = vmul.f32 %v227, %v253
      %v271 = vmul.f32 %v228, %v254
      %v274 = vcombine.low %v270, %v270
      %v275 = vcombine.low %v271, %v271
      %278 = vst [vmem:[#allocation2] sm:$0xf0] %v274
      %279 = vst [vmem:[#allocation2 + $0x8] sm:$0xf0] %v270
      %vm280 = vcmask 261124
      %281 = vst.msk [vmem:[#allocation2 + $0x10] sm:$0xf0] %vm280, %v275
      %v282 = vmul.f32 %v231, %v253
      %v283 = vmul.f32 %v232, %v254
      %v284 = vmul.f32 %v221, %v259
      %v285 = vmul.f32 %v222, %v260
      %v286 = vadd.f32 %v282, %v284
      %v287 = vadd.f32 %v283, %v285
      %v289 = vcombine.high %v286, %v286
      %291 = vst [vmem:[#allocation2 + $0x18] sm:$0xf] %v286
      %292 = vst [vmem:[#allocation2 + $0x20] sm:$0xf] %v289
      %293 = vst.msk [vmem:[#allocation2 + $0x28] sm:$0xf] %vm268, %v287
      %v294 = vmul.f32 %v227, %v259
      %v295 = vmul.f32 %v228, %v260
      %v298 = vcombine.low %v294, %v294
      %v299 = vcombine.low %v295, %v295
      %302 = vst [vmem:[#allocation2 + $0x18] sm:$0xf0] %v298
      %303 = vst [vmem:[#allocation2 + $0x20] sm:$0xf0] %v294
      %304 = vst.msk [vmem:[#allocation2 + $0x28] sm:$0xf0] %vm280, %v299
      %v305 = vmul.f32 %v231, %v259
      %v306 = vmul.f32 %v232, %v260
      %v308 = vcombine.high %v305, %v305
      %310 = vst [vmem:[#allocation2 + $0x30] sm:$0xf] %v305
      %311 = vst [vmem:[#allocation2 + $0x38] sm:$0xf] %v308
      %312 = vst.msk [vmem:[#allocation2 + $0x40] sm:$0xf] %vm268, %v306
      %v313 = vld [vmem:[%s1] sm:$0xff]
      %v314 = vld [vmem:[%s1 + $0x8] sm:$0xff]
      %v315 = vld [vmem:[%s1 + $0x10] sm:$0xff]
      %v316 = vld [vmem:[%s1 + $0x18] sm:$0xff]
      %v317 = vld [vmem:[%s1 + $0x20] sm:$0xf]
      %v318 = vld [vmem:[#allocation2] sm:$0xff]
      %v319 = vld [vmem:[#allocation2 + $0x8] sm:$0xff]
      %v320 = vld [vmem:[#allocation2 + $0x10] sm:$0xff]
      %v321 = vld [vmem:[#allocation2 + $0x18] sm:$0xff]
      %v322 = vld [vmem:[#allocation2 + $0x20] sm:$0xff]
      %v323 = vld [vmem:[#allocation2 + $0x28] sm:$0xff]
      %v324 = vld [vmem:[#allocation2 + $0x30] sm:$0xf]
      %v325 = vld [vmem:[#allocation2 + $0x38] sm:$0xf]
      %v326 = vld [vmem:[#allocation2 + $0x40] sm:$0xf]
      %vm327 = vcmask 162816
      %v329 = vsel %vm327, %v313, 0
      %v332 = vsel %vm327, %v314, 0
      %v335 = vsel %vm327, %v315, 0
      %v338 = vsel %vm327, %v316, 0
      %v341 = vsel %vm327, %v317, 0
      %vm343 = vcmask 1043456
      %v345 = vsel %vm343, %v324, 0
      %v348 = vsel %vm343, %v325, 0
      %v351 = vsel %vm343, %v326, 0
      %353 = vmatprep.subr.mxu0 %v319
      %354 = vmatpush1.msra.mxu0 %v318
      %355 = vmatprep.subr.mxu0 %v322
      %356 = vmatpush1.msra.mxu0 %v321
      %357 = vmatprep.subr.mxu0 %v348
      %358 = vmatpush1.msra.mxu0 %v345
      %359 = vmatprep.subr.mxu0 0.0
      %360 = vmatpush1.msra.mxu0 0.0
      %361 = vmatprep.subr.mxu0 0.0
      %362 = vmatpush1.msra.mxu0 0.0
      %363 = vmatprep.subr.mxu0 0.0
      %364 = vmatpush1.msra.mxu0 0.0
      %365 = vmatprep.subr.mxu0 0.0
      %366 = vmatpush1.msra.mxu0 0.0
      %367 = vmatprep.subr.mxu0 0.0
      %368 = vmatpush1.msra.mxu0 0.0
      %369 = vmatprep.subr.mxu0 0.0
      %370 = vmatpush1.msra.mxu0 0.0
      %371 = vmatprep.subr.mxu0 0.0
      %372 = vmatpush1.msra.mxu0 0.0
      %373 = vmatprep.subr.mxu0 0.0
      %374 = vmatpush1.msra.mxu0 0.0
      %375 = vmatprep.subr.mxu0 0.0
      %376 = vmatpush1.msra.mxu0 0.0
      %377 = vmatprep.subr.mxu0 0.0
      %378 = vmatpush1.msra.mxu0 0.0
      %379 = vmatprep.subr.mxu0 0.0
      %380 = vmatpush1.msra.mxu0 0.0
      %381 = vmatprep.subr.mxu0 0.0
      %382 = vmatpush1.msra.mxu0 0.0
      %383 = vmatprep.subr.mxu0 0.0
      %384 = vmatpush1.msra.mxu0 0.0
      %385 = vmatprep.subr.mxu0 0.0
      %386 = vmatpush1.msra.mxu0 0.0
      %387 = vmatprep.subr.mxu0 0.0
      %388 = vmatpush1.msra.mxu0 0.0
      %389 = vmatprep.subr.mxu0 0.0
      %390 = vmatpush1.msra.mxu0 0.0
      %391 = vmatprep.subr.mxu0 0.0
      %392 = vmatpush1.msra.mxu0 0.0
      %393 = vmatprep.subr.mxu0 0.0
      %394 = vmatpush1.msra.mxu0 0.0
      %395 = vmatprep.subr.mxu0 0.0
      %396 = vmatpush1.msra.mxu0 0.0
      %397 = vmatprep.subr.mxu0 0.0
      %398 = vmatpush1.msra.mxu0 0.0
      %399 = vmatprep.subr.mxu0 0.0
      %400 = vmatpush1.msra.mxu0 0.0
      %401 = vmatprep.subr.mxu0 0.0
      %402 = vmatpush1.msra.mxu0 0.0
      %403 = vmatprep.subr.mxu0 0.0
      %404 = vmatpush1.msra.mxu0 0.0
      %405 = vmatprep.subr.mxu0 0.0
      %406 = vmatpush1.msra.mxu0 0.0
      %407 = vmatprep.subr.mxu0 0.0
      %408 = vmatpush1.msra.mxu0 0.0
      %409 = vmatprep.subr.mxu0 0.0
      %410 = vmatpush1.msra.mxu0 0.0
      %411 = vmatprep.subr.mxu0 0.0
      %412 = vmatpush1.msra.mxu0 0.0
      %413 = vmatprep.subr.mxu0 0.0
      %414 = vmatpush1.msra.mxu0 0.0
      %415 = vmatprep.subr.mxu0 0.0
      %416 = vmatpush1.msra.mxu0 0.0
      %417 = vmatprep.mubr.f32.mxu0 0.0
      %418 = vmatmul.mubr.f32.gmra.mrb[0].mxu0 %v329
      %v419 = vpop.f32.mrb[0].mxu0
      %v420 = vadd.f32 0.0, %v419
      %v421 = vpop.f32.mrb[0].mxu0
      %v422 = vadd.f32 0.0, %v421
      %423 = vmatprep.mubr.f32.mxu0 0.0
      %424 = vmatmul.mubr.f32.gmra.mrb[0].mxu0 %v332
      %v425 = vpop.f32.mrb[0].mxu0
      %v426 = vadd.f32 0.0, %v425
      %v427 = vpop.f32.mrb[0].mxu0
      %v428 = vadd.f32 0.0, %v427
      %429 = vmatprep.mubr.f32.mxu0 0.0
      %430 = vmatmul.mubr.f32.gmra.mrb[0].mxu0 %v335
      %v431 = vpop.f32.mrb[0].mxu0
      %v432 = vadd.f32 0.0, %v431
      %v433 = vpop.f32.mrb[0].mxu0
      %v434 = vadd.f32 0.0, %v433
      %435 = vmatprep.mubr.f32.mxu0 0.0
      %436 = vmatmul.mubr.f32.gmra.mrb[0].mxu0 %v338
      %v437 = vpop.f32.mrb[0].mxu0
      %v438 = vadd.f32 0.0, %v437
      %v439 = vpop.f32.mrb[0].mxu0
      %v440 = vadd.f32 0.0, %v439
      %441 = vmatprep.mubr.f32.mxu0 0.0
      %442 = vmatmul.mubr.f32.gmra.mrb[0].mxu0 %v341
      %v443 = vpop.f32.mrb[0].mxu0
      %v444 = vadd.f32 0.0, %v443
      %v445 = vpop.f32.mrb[0].mxu0
      %v446 = vadd.f32 0.0, %v445
      %447 = vdwg.mxu0
      %448 = vmatprep.subr.mxu0 0.0
      %449 = vmatpush1.msra.mxu0 %v320
      %450 = vmatprep.subr.mxu0 0.0
      %451 = vmatpush1.msra.mxu0 %v323
      %452 = vmatprep.subr.mxu0 0.0
      %453 = vmatpush1.msra.mxu0 %v351
      %454 = vmatprep.subr.mxu0 0.0
      %455 = vmatpush1.msra.mxu0 0.0
      %456 = vmatprep.subr.mxu0 0.0
      %457 = vmatpush1.msra.mxu0 0.0
      %458 = vmatprep.subr.mxu0 0.0
      %459 = vmatpush1.msra.mxu0 0.0
      %460 = vmatprep.subr.mxu0 0.0
      %461 = vmatpush1.msra.mxu0 0.0
      %462 = vmatprep.subr.mxu0 0.0
      %463 = vmatpush1.msra.mxu0 0.0
      %464 = vmatprep.subr.mxu0 0.0
      %465 = vmatpush1.msra.mxu0 0.0
      %466 = vmatprep.subr.mxu0 0.0
      %467 = vmatpush1.msra.mxu0 0.0
      %468 = vmatprep.subr.mxu0 0.0
      %469 = vmatpush1.msra.mxu0 0.0
      %470 = vmatprep.subr.mxu0 0.0
      %471 = vmatpush1.msra.mxu0 0.0
      %472 = vmatprep.subr.mxu0 0.0
      %473 = vmatpush1.msra.mxu0 0.0
      %474 = vmatprep.subr.mxu0 0.0
      %475 = vmatpush1.msra.mxu0 0.0
      %476 = vmatprep.subr.mxu0 0.0
      %477 = vmatpush1.msra.mxu0 0.0
      %478 = vmatprep.subr.mxu0 0.0
      %479 = vmatpush1.msra.mxu0 0.0
      %480 = vmatprep.subr.mxu0 0.0
      %481 = vmatpush1.msra.mxu0 0.0
      %482 = vmatprep.subr.mxu0 0.0
      %483 = vmatpush1.msra.mxu0 0.0
      %484 = vmatprep.subr.mxu0 0.0
      %485 = vmatpush1.msra.mxu0 0.0
      %486 = vmatprep.subr.mxu0 0.0
      %487 = vmatpush1.msra.mxu0 0.0
      %488 = vmatprep.subr.mxu0 0.0
      %489 = vmatpush1.msra.mxu0 0.0
      %490 = vmatprep.subr.mxu0 0.0
      %491 = vmatpush1.msra.mxu0 0.0
      %492 = vmatprep.subr.mxu0 0.0
      %493 = vmatpush1.msra.mxu0 0.0
      %494 = vmatprep.subr.mxu0 0.0
      %495 = vmatpush1.msra.mxu0 0.0
      %496 = vmatprep.subr.mxu0 0.0
      %497 = vmatpush1.msra.mxu0 0.0
      %498 = vmatprep.subr.mxu0 0.0
      %499 = vmatpush1.msra.mxu0 0.0
      %500 = vmatprep.subr.mxu0 0.0
      %501 = vmatpush1.msra.mxu0 0.0
      %502 = vmatprep.subr.mxu0 0.0
      %503 = vmatpush1.msra.mxu0 0.0
      %504 = vmatprep.subr.mxu0 0.0
      %505 = vmatpush1.msra.mxu0 0.0
      %506 = vmatprep.subr.mxu0 0.0
      %507 = vmatpush1.msra.mxu0 0.0
      %508 = vmatprep.subr.mxu0 0.0
      %509 = vmatpush1.msra.mxu0 0.0
      %510 = vmatprep.subr.mxu0 0.0
      %511 = vmatpush1.msra.mxu0 0.0
      %512 = vmatprep.mubr.f32.mxu0 0.0
      %513 = vmatmul.mubr.f32.gmra.mrb[0].mxu0 %v329
      %v514 = vpop.f32.mrb[0].mxu0
      %v515 = vadd.f32 0.0, %v514
      %v516 = vpop.f32.mrb[0].mxu0
      %517 = vmatprep.mubr.f32.mxu0 0.0
      %518 = vmatmul.mubr.f32.gmra.mrb[0].mxu0 %v332
      %v519 = vpop.f32.mrb[0].mxu0
      %v520 = vadd.f32 0.0, %v519
      %v521 = vpop.f32.mrb[0].mxu0
      %522 = vmatprep.mubr.f32.mxu0 0.0
      %523 = vmatmul.mubr.f32.gmra.mrb[0].mxu0 %v335
      %v524 = vpop.f32.mrb[0].mxu0
      %v525 = vadd.f32 0.0, %v524
      %v526 = vpop.f32.mrb[0].mxu0
      %527 = vmatprep.mubr.f32.mxu0 0.0
      %528 = vmatmul.mubr.f32.gmra.mrb[0].mxu0 %v338
      %v529 = vpop.f32.mrb[0].mxu0
      %v530 = vadd.f32 0.0, %v529
      %v531 = vpop.f32.mrb[0].mxu0
      %532 = vmatprep.mubr.f32.mxu0 0.0
      %533 = vmatmul.mubr.f32.gmra.mrb[0].mxu0 %v341
      %v534 = vpop.f32.mrb[0].mxu0
      %v535 = vadd.f32 0.0, %v534
      %v536 = vpop.f32.mrb[0].mxu0
      %537 = vdwg.mxu0
      %538 = vst [vmem:[#allocation3] sm:$0xff] 0.0
      %vm539 = vcmask 568320
      %540 = vst.msk [vmem:[#allocation3 + $0x8] sm:$0xf] %vm539, 0.0
      %v541 = vld [vmem:[#allocation3] sm:$0xff]
      %v542 = vld [vmem:[#allocation3 + $0x8] sm:$0xf]
      %v546 = vcombine.low %v420, %v422
      %v548 = vadd.f32 %v541, %v546
      %v549 = vadd.f32 %v542, %v515
      %550 = vst [vmem:[#allocation3] sm:$0xff] %v548
      %551 = vst.msk [vmem:[#allocation3 + $0x8] sm:$0xf] %vm268, %v549
      %v552 = vld [vmem:[#allocation3] sm:$0xff]
      %v553 = vld [vmem:[#allocation3 + $0x8] sm:$0xf]
      %v554 = vcombine.high %v420, %v422
      %v555 = vcombine.high %v515, %v515
      %556 = vrot.lane.b32.xlu0 %v554, 1
      %v557 = vpop.permute.xlu0 %556
      %558 = vrot.lane.b32.xlu0 %v555, 1
      %v559 = vpop.permute.xlu0 %558
      %v560 = vrot.slane %v557, 4
      %vm561 = vcmask 7168
      %v562 = vsel %vm561, %v560, %v557
      %v563 = vsel %vm561, %v560, %v559
      %v566 = vadd.f32 %v552, %v562
      %v567 = vadd.f32 %v553, %v563
      %vm568 = vcmask 1043464
      %vm569 = vcmask 1047556
      %vm570 = vmor %vm569, %vm568
      %571 = vst.msk [vmem:[#allocation3] sm:$0xff] %vm570, %v566
      %vm572 = vcmask 265216
      %573 = vst.msk [vmem:[#allocation3 + $0x8] sm:$0xf] %vm572, %v567
      %v574 = vld [vmem:[#allocation3] sm:$0xff]
      %v575 = vld [vmem:[#allocation3 + $0x8] sm:$0xf]
      %v579 = vcombine.low %v426, %v428
      %580 = vrot.lane.b32.xlu0 %v579, 2
      %v581 = vpop.permute.xlu0 %580
      %582 = vrot.lane.b32.xlu0 %v520, 2
      %v583 = vpop.permute.xlu0 %582
      %v584 = vrot.slane %v581, 4
      %vm585 = vcmask 15360
      %v586 = vsel %vm585, %v584, %v581
      %v587 = vsel %vm585, %v584, %v583
      %v590 = vadd.f32 %v574, %v586
      %v591 = vadd.f32 %v575, %v587
      %vm592 = vcmask 1043472
      %vm593 = vmor %vm569, %vm592
      %594 = vst.msk [vmem:[#allocation3] sm:$0xff] %vm593, %v590
      %vm595 = vcmask 273408
      %596 = vst.msk [vmem:[#allocation3 + $0x8] sm:$0xf] %vm595, %v591
      %v597 = vld [vmem:[#allocation3] sm:$0xff]
      %v598 = vld [vmem:[#allocation3 + $0x8] sm:$0xf]
      %v599 = vcombine.high %v426, %v428
      %v600 = vcombine.high %v520, %v520
      %601 = vrot.lane.b32.xlu0 %v599, 18
      %v602 = vpop.permute.xlu0 %601
      %603 = vrot.lane.b32.xlu0 %v600, 18
      %v604 = vpop.permute.xlu0 %603
      %v605 = vrot.slane %v602, 4
      %vm606 = vcmask 146432
      %v607 = vsel %vm606, %v605, %v602
      %v608 = vsel %vm606, %v605, %v604
      %v611 = vadd.f32 %v597, %v607
      %v612 = vadd.f32 %v598, %v608
      %vm613 = vcmask 1043600
      %vm614 = vmor %vm569, %vm613
      %615 = vst.msk [vmem:[#allocation3] sm:$0xff] %vm614, %v611
      %vm616 = vcmask 404480
      %617 = vst.msk [vmem:[#allocation3 + $0x8] sm:$0xf] %vm616, %v612
      %v618 = vld [vmem:[#allocation3] sm:$0xff]
      %v619 = vld [vmem:[#allocation3 + $0x8] sm:$0xf]
      %v623 = vcombine.low %v432, %v434
      %624 = vrot.lane.b32.xlu0 %v623, 19
      %v625 = vpop.permute.xlu0 %624
      %626 = vrot.lane.b32.xlu0 %v525, 19
      %v627 = vpop.permute.xlu0 %626
      %v628 = vrot.slane %v625, 4
      %vm629 = vcmask 154624
      %v630 = vsel %vm629, %v628, %v625
      %v631 = vsel %vm629, %v628, %v627
      %v634 = vadd.f32 %v618, %v630
      %v635 = vadd.f32 %v619, %v631
      %vm636 = vcmask 1043608
      %vm637 = vmor %vm569, %vm636
      %638 = vst.msk [vmem:[#allocation3] sm:$0xff] %vm637, %v634
      %vm639 = vcmask 412672
      %640 = vst.msk [vmem:[#allocation3 + $0x8] sm:$0xf] %vm639, %v635
      %v641 = vld [vmem:[#allocation3] sm:$0xff]
      %v642 = vld [vmem:[#allocation3 + $0x8] sm:$0xf]
      %v643 = vcombine.high %v432, %v434
      %v644 = vcombine.high %v525, %v525
      %645 = vrot.lane.b32.xlu0 %v643, 20
      %v646 = vpop.permute.xlu0 %645
      %647 = vrot.lane.b32.xlu0 %v644, 20
      %v648 = vpop.permute.xlu0 %647
      %v649 = vrot.slane %v646, 4
      %v650 = vsel %vm327, %v649, %v646
      %v651 = vsel %vm327, %v649, %v648
      %v654 = vadd.f32 %v641, %v650
      %v655 = vadd.f32 %v642, %v651
      %vm656 = vcmask 1043616
      %vm657 = vmor %vm569, %vm656
      %658 = vst.msk [vmem:[#allocation3] sm:$0xff] %vm657, %v654
      %vm659 = vcmask 420864
      %660 = vst.msk [vmem:[#allocation3 + $0x8] sm:$0xf] %vm659, %v655
      %v661 = vld [vmem:[#allocation3] sm:$0xff]
      %v662 = vld [vmem:[#allocation3 + $0x8] sm:$0xf]
      %v666 = vcombine.low %v438, %v440
      %667 = vrot.lane.b32.xlu0 %v666, 36
      %v668 = vpop.permute.xlu0 %667
      %669 = vrot.lane.b32.xlu0 %v530, 36
      %v670 = vpop.permute.xlu0 %669
      %v671 = vrot.slane %v668, 4
      %vm672 = vcmask 293888
      %v673 = vsel %vm672, %v671, %v668
      %v674 = vsel %vm672, %v671, %v670
      %v677 = vadd.f32 %v661, %v673
      %v678 = vadd.f32 %v662, %v674
      %vm679 = vcmask 1043744
      %vm680 = vmor %vm569, %vm679
      %681 = vst.msk [vmem:[#allocation3] sm:$0xff] %vm680, %v677
      %vm682 = vcmask 551936
      %683 = vst.msk [vmem:[#allocation3 + $0x8] sm:$0xf] %vm682, %v678
      %v684 = vld [vmem:[#allocation3] sm:$0xff]
      %v685 = vld [vmem:[#allocation3 + $0x8] sm:$0xf]
      %v686 = vcombine.high %v438, %v440
      %v687 = vcombine.high %v530, %v530
      %688 = vrot.lane.b32.xlu0 %v686, 37
      %v689 = vpop.permute.xlu0 %688
      %690 = vrot.lane.b32.xlu0 %v687, 37
      %v691 = vpop.permute.xlu0 %690
      %v692 = vrot.slane %v689, 4
      %vm693 = vcmask 302080
      %v694 = vsel %vm693, %v692, %v689
      %v695 = vsel %vm693, %v692, %v691
      %v698 = vadd.f32 %v684, %v694
      %v699 = vadd.f32 %v685, %v695
      %vm700 = vcmask 1043752
      %vm701 = vmor %vm569, %vm700
      %702 = vst.msk [vmem:[#allocation3] sm:$0xff] %vm701, %v698
      %vm703 = vcmask 560128
      %704 = vst.msk [vmem:[#allocation3 + $0x8] sm:$0xf] %vm703, %v699
      %v705 = vld [vmem:[#allocation3] sm:$0xff]
      %v706 = vld [vmem:[#allocation3 + $0x8] sm:$0xf]
      %v710 = vcombine.low %v444, %v446
      %711 = vrot.lane.b32.xlu0 %v710, 38
      %v712 = vpop.permute.xlu0 %711
      %713 = vrot.lane.b32.xlu0 %v535, 38
      %v714 = vpop.permute.xlu0 %713
      %v715 = vrot.slane %v712, 4
      %vm716 = vcmask 310272
      %v717 = vsel %vm716, %v715, %v712
      %v718 = vsel %vm716, %v715, %v714
      %v721 = vadd.f32 %v705, %v717
      %v722 = vadd.f32 %v706, %v718
      %vm723 = vcmask 1043760
      %vm724 = vmor %vm569, %vm723
      %725 = vst.msk [vmem:[#allocation3] sm:$0xff] %vm724, %v721
      %726 = vst.msk [vmem:[#allocation3 + $0x8] sm:$0xf] %vm539, %v722
      %v727 = vld [vmem:[#allocation3] sm:$0xff]
      %v728 = vld [vmem:[#allocation3 + $0x8] sm:$0xf]
      %729 = vst [vmem:[%s170] sm:$0xff] %v727
      %730 = vst.msk [vmem:[%s170 + $0x8] sm:$0xf] %vm682, %v728
      %p731 = scmp.lt.s32.totalorder %s14, 1
      %s732 = scalar_select %p731, %s14, 1
      %s733 = smul.addr %s732, 3
      %s734 = smul.addr %s733, 4
      %s735 = scalar_lea.vmem %s3, %s734
      // Predicated region
      $region33: #{forward.1} parent=31 // pred_check
        %p736 = pneg %p100
      $region34: #{forward.1} parent=31 // pred_check_branch
        %738 = sbr.rel (%p736) target = $region36
      $region35: #{forward.1} parent=31 // pred_region
        _
      $region36: #{forward.1} parent=31 // pred_fallthru
        _
    $region32: #{forward.1} parent=5 // pred_fallthru
      _
    %p739 = scmp.le.s32.totalorder 2, %s9
    // Predicated region
    $region37: #{forward.1} parent=5 // pred_check
      %p740 = pneg %p739
    $region38: #{forward.1} parent=5 // pred_check_branch
      %742 = sbr.rel (%p740) target = $region40
    $region39: #{forward.1} parent=5 // pred_region
      %s743 = ssub.s32 %s9, 2
      // Predicated region
      $region41: #{forward.1} parent=39 // pred_check
        %p744 = pneg %p106
      $region42: #{forward.1} parent=39 // pred_check_branch
        %746 = sbr.rel (%p744) target = $region44
      $region43: #{forward.1} parent=39 // pred_region
        %p747 = scmp.lt.s32.totalorder %s15, 1
        %s748 = scalar_select %p747, %s15, 1
        %s749 = smul.addr %s748, 3
        %s750 = smul.addr %s749, 4
        %s751 = scalar_lea.vmem %s3, %s750
      $region44: #{forward.1} parent=39 // pred_fallthru
        _
    $region40: #{forward.1} parent=5 // pred_fallthru
      _
  $region6: #{forward.1} parent=0 // loop_footer
    %s13 = sadd.s32 1, %s9
  $region7: #{forward.1} parent=0 // loop_footer_branch
    %8 = sbr.rel target = $region3
  $region8: #{forward.1} parent=0 // loop_exit
    _

</llo_original>
